<compile_context>
chip_gen: v7x
topology: tpu7x:2x2x1
jax: 0.10.0
libtpu: 0.0.40
codegen_flags: <defaults>
</compile_context>

<pallas_src>
import functools

import jax
import jax.numpy as jnp
from jax.experimental import pallas as pl
from jax.experimental.pallas import tpu as pltpu

# ---- benchmark hyper-parameters (mirror the PyTorch script globals) ---------
INPUT_FEATURE_COUNT = 32
NEURON_COUNTS = [64, 64, 16]
# activation flags per layer AFTER the final `layers.pop()`:
APPLY_RELU = (True, True, False)

LANE = 128      # TPU vreg lane width
SUBLANE = 8     # TPU vreg sublane count


def _round_up(x, m):
    return ((x + m - 1) // m) * m


# ---- fused Pallas kernel ----------------------------------------------------
def _fused_mlp_kernel(*refs, num_layers, apply_relu):
    """refs = (x_ref, w1, b1, w2, b2, ..., wL, bL, o_ref).

    Whole forward pass in-register/VMEM: matmuls hit the MXU back-to-back
    (fill/drain of layer i overlaps the VPU bias+ReLU of layer i-1); the
    intermediates never touch HBM.  Only the final (tile_b, n_out) result is
    stored.
    """
    x_ref = refs[0]
    o_ref = refs[-1]
    p = refs[1:-1]

    h = x_ref[...]
    for i in range(num_layers):
        w_ref = p[2 * i]
        b_ref = p[2 * i + 1]
        h = jnp.dot(h, w_ref[...], preferred_element_type=jnp.float32)
        h = h + b_ref[...]
        if apply_relu[i]:
            h = jnp.maximum(h, 0.0)
    o_ref[...] = h.astype(o_ref.dtype)


def _select_batch_tile(B, batch_tile):
    """Pick the per-grid-step batch tile.

    * Small batch -> one program covering the whole batch (block == full dim,
      so any B is layout-legal).
    * Larger batch -> aim for >= 2 programs (v7x has 2 TensorCores and the
      batch axis is marked "parallel"), with an 8-aligned tile.  Prefer a tile
      that divides B exactly so no in-jit x padding pass is needed.
    """
    target = min(batch_tile, _round_up(pl.cdiv(B, 2), SUBLANE))
    if target >= B:
        return B
    for t in range(target, SUBLANE - 1, -SUBLANE):
        if B % t == 0:
            return t
    return target


def fused_mlp(x, packed_params, *, apply_relu=APPLY_RELU, batch_tile=512):
    """x:(B, K) through all layers in one pallas_call.

    Returns (B_padded, n_out) float32; B_padded == B unless no 8-aligned tile
    divides B (caller slices the batch back in that case).
    """
    B, K = x.shape
    num_layers = len(packed_params) // 2
    n_out = packed_params[-2].shape[1]          # true final width (16)

    tile_b = _select_batch_tile(B, batch_tile)
    grid_b = pl.cdiv(B, tile_b)
    b_pad = grid_b * tile_b
    if b_pad != B:
        # Only reached when no multiple-of-8 tile divides B (extra HBM pass).
        x = jnp.pad(x, ((0, b_pad - B), (0, 0)))

    # x is tiled over the batch grid axis; every weight/bias is a single
    # full-array block held resident in VMEM (index_map -> block 0, so Pallas
    # only DMAs them once).
    in_specs = [pl.BlockSpec((tile_b, K), lambda i: (i, 0))]
    for prm in packed_params:
        in_specs.append(pl.BlockSpec(prm.shape, lambda i: (0, 0)))

    # True-width output block: last dim equals the full array dim (legal),
    # avoiding the 8x over-wide padded writeback + wrapper column slice.
    out_spec = pl.BlockSpec((tile_b, n_out), lambda i: (i, 0))

    kernel = functools.partial(
        _fused_mlp_kernel, num_layers=num_layers, apply_relu=tuple(apply_relu)
    )

    return pl.pallas_call(
        kernel,
        out_shape=jax.ShapeDtypeStruct((b_pad, n_out), x.dtype),
        grid_spec=pl.GridSpec(
            grid=(grid_b,),
            in_specs=in_specs,
            out_specs=out_spec,
        ),
        compiler_params=pltpu.CompilerParams(
            dimension_semantics=("parallel",),
        ),
    )(x, *packed_params)


# ---- parameter init / packing (all layout plumbing outside the jit path) ----
def init_params(key):
    """Deterministic nn.Linear-style init; weights stored transposed (K, N)."""
    params = []
    in_f = INPUT_FEATURE_COUNT
    for out_f in NEURON_COUNTS:
        key, kw, kb = jax.random.split(key, 3)
        bound = 1.0 / jnp.sqrt(in_f)
        # PyTorch Linear weight is (out, in); keep it transposed as (in, out).
        w_t = jax.random.uniform(
            kw, (in_f, out_f), jnp.float32, minval=-bound, maxval=bound
        )
        b = jax.random.uniform(
            kb, (out_f,), jnp.float32, minval=-bound, maxval=bound
        )
        params.append((w_t, b))
        in_f = out_f
    return params


def pack_params(params, lane=LANE):
    """Kernel-ready flat tuple (w1,b1,...).

    * Biases as (1, N) VMEM tiles.
    * Hidden layer widths zero-padded to a lane multiple (128) so every
      intermediate, MXU N dimension and VPU bias+ReLU stage is lane-dense;
      each layer's contraction (row) dim is padded to match the previous
      layer's padded width.  Zero padding is exact: 0-weight cols + 0 bias +
      ReLU stay 0 and contribute 0 to the next contraction.
    * The FINAL layer keeps its true width so the kernel's only HBM store is
      exactly (tile_b, n_out) — no over-wide writeback.
    """
    packed = []
    num = len(params)
    prev_pad = params[0][0].shape[0]            # input features (32), unpadded
    for idx, (w_t, b) in enumerate(params):
        k, n = w_t.shape
        k_pad = prev_pad
        n_pad = _round_up(n, lane) if idx < num - 1 else n
        w_t = jnp.pad(w_t, ((0, k_pad - k), (0, n_pad - n)))
        b = jnp.pad(b, (0, n_pad - n))
        packed.append(w_t)
        packed.append(b.reshape(1, -1))
        prev_pad = n_pad
    return tuple(packed)


# ---- forward ----------------------------------------------------------------
@jax.jit
def mlp_forward(packed_params, x):
    B = x.shape[0]
    y = fused_mlp(x, packed_params)
    if y.shape[0] != B:                 # only when B needed batch padding
        y = y[:B]
    return y


def mlp_reference(params, x):
    h = x
    for (w_t, b), relu in zip(params, APPLY_RELU):
        h = h @ w_t + b
        if relu:
            h = jnp.maximum(h, 0.0)
    return h


if __name__ == "__main__":
    key = jax.random.PRNGKey(0)
    key, kx, kx2 = jax.random.split(key, 3)

    params = init_params(key)
    packed = pack_params(params)        # one-time layout work (outside jit)

    # Benchmark shape: batch=8 -> single grid program, whole batch in VMEM.
    batch = 8
    x = jax.random.normal(kx, (batch, INPUT_FEATURE_COUNT), jnp.float32)
    out = mlp_forward(packed, x)
    out = jax.block_until_ready(out)
    ref = mlp_reference(params, x)
    assert out.shape == (batch, NEURON_COUNTS[-1])
    assert jnp.allclose(out, ref, atol=1e-5, rtol=1e-5)

    # Also exercise the multi-program (tiled / megacore) path at a small size.
    batch2 = 48                         # -> tile 24, grid (2,), no x padding
    x2 = jax.random.normal(kx2, (batch2, INPUT_FEATURE_COUNT), jnp.float32)
    out2 = jax.block_until_ready(mlp_forward(packed, x2))
    ref2 = mlp_reference(params, x2)
    assert out2.shape == (batch2, NEURON_COUNTS[-1])
    assert jnp.allclose(out2, ref2, atol=1e-5, rtol=1e-5)

    print("KERNEL_OK")
</pallas_src>

<mosaic_0001>
module attributes {stable_mosaic.version = 11 : i64} {
  func.func @_fused_mlp_kernel(%arg0: i32, %arg1: memref<8x32xf32, #tpu.memory_space<vmem>>, %arg2: memref<32x128xf32, #tpu.memory_space<vmem>>, %arg3: memref<1x128xf32, #tpu.memory_space<vmem>>, %arg4: memref<128x128xf32, #tpu.memory_space<vmem>>, %arg5: memref<1x128xf32, #tpu.memory_space<vmem>>, %arg6: memref<128x16xf32, #tpu.memory_space<vmem>>, %arg7: memref<1x16xf32, #tpu.memory_space<vmem>>, %arg8: memref<8x16xf32, #tpu.memory_space<vmem>>) attributes {dimension_semantics = [#tpu.dimension_semantics<parallel>], iteration_bounds = array<i64: 1>, scalar_prefetch = 0 : i64, scratch_operands = 0 : i64, tpu.core_type = #tpu.core_type<tc>, window_params = [{transform_indices = @transform_0, window_bounds = array<i64: 8, 32>}, {pipeline_mode = #tpu.pipeline_mode<synchronous>, transform_indices = @transform_1, window_bounds = array<i64: 32, 128>}, {pipeline_mode = #tpu.pipeline_mode<synchronous>, transform_indices = @transform_2, window_bounds = array<i64: 1, 128>}, {pipeline_mode = #tpu.pipeline_mode<synchronous>, transform_indices = @transform_3, window_bounds = array<i64: 128, 128>}, {pipeline_mode = #tpu.pipeline_mode<synchronous>, transform_indices = @transform_4, window_bounds = array<i64: 1, 128>}, {pipeline_mode = #tpu.pipeline_mode<synchronous>, transform_indices = @transform_5, window_bounds = array<i64: 128, 16>}, {pipeline_mode = #tpu.pipeline_mode<synchronous>, transform_indices = @transform_6, window_bounds = array<i64: 1, 16>}, {transform_indices = @transform_7, window_bounds = array<i64: 8, 16>}]} {
    %c0 = arith.constant 0 : index
    %c0_0 = arith.constant 0 : index
    %0 = vector.load %arg1[%c0, %c0_0] : memref<8x32xf32, #tpu.memory_space<vmem>>, vector<8x32xf32>
    %c0_1 = arith.constant 0 : index
    %c0_2 = arith.constant 0 : index
    %1 = vector.load %arg2[%c0_1, %c0_2] : memref<32x128xf32, #tpu.memory_space<vmem>>, vector<32x128xf32>
    %cst = arith.constant dense<0.000000e+00> : vector<8x128xf32>
    %2 = tpu.matmul %0, %1, %cst {dimension_numbers = #tpu.dot_dimension_numbers<[1], [0], [0], [1], [0, 0, 1, 1], [], []>} : vector<8x32xf32>, vector<32x128xf32>, vector<8x128xf32> -> vector<8x128xf32>
    %c0_3 = arith.constant 0 : index
    %c0_4 = arith.constant 0 : index
    %3 = vector.load %arg3[%c0_3, %c0_4] : memref<1x128xf32, #tpu.memory_space<vmem>>, vector<1x128xf32>
    %4 = vector.broadcast %3 : vector<1x128xf32> to vector<8x128xf32>
    %5 = arith.addf %2, %4 : vector<8x128xf32>
    %cst_5 = arith.constant 0.000000e+00 : f32
    %6 = vector.broadcast %cst_5 : f32 to vector<8x128xf32>
    %7 = arith.maximumf %5, %6 : vector<8x128xf32>
    %c0_6 = arith.constant 0 : index
    %c0_7 = arith.constant 0 : index
    %8 = vector.load %arg4[%c0_6, %c0_7] : memref<128x128xf32, #tpu.memory_space<vmem>>, vector<128x128xf32>
    %cst_8 = arith.constant dense<0.000000e+00> : vector<8x128xf32>
    %9 = tpu.matmul %7, %8, %cst_8 {dimension_numbers = #tpu.dot_dimension_numbers<[1], [0], [0], [1], [0, 0, 1, 1], [], []>} : vector<8x128xf32>, vector<128x128xf32>, vector<8x128xf32> -> vector<8x128xf32>
    %c0_9 = arith.constant 0 : index
    %c0_10 = arith.constant 0 : index
    %10 = vector.load %arg5[%c0_9, %c0_10] : memref<1x128xf32, #tpu.memory_space<vmem>>, vector<1x128xf32>
    %11 = vector.broadcast %10 : vector<1x128xf32> to vector<8x128xf32>
    %12 = arith.addf %9, %11 : vector<8x128xf32>
    %cst_11 = arith.constant 0.000000e+00 : f32
    %13 = vector.broadcast %cst_11 : f32 to vector<8x128xf32>
    %14 = arith.maximumf %12, %13 : vector<8x128xf32>
    %c0_12 = arith.constant 0 : index
    %c0_13 = arith.constant 0 : index
    %15 = vector.load %arg6[%c0_12, %c0_13] : memref<128x16xf32, #tpu.memory_space<vmem>>, vector<128x16xf32>
    %cst_14 = arith.constant dense<0.000000e+00> : vector<8x16xf32>
    %16 = tpu.matmul %14, %15, %cst_14 {dimension_numbers = #tpu.dot_dimension_numbers<[1], [0], [0], [1], [0, 0, 1, 1], [], []>} : vector<8x128xf32>, vector<128x16xf32>, vector<8x16xf32> -> vector<8x16xf32>
    %c0_15 = arith.constant 0 : index
    %c0_16 = arith.constant 0 : index
    %17 = vector.load %arg7[%c0_15, %c0_16] : memref<1x16xf32, #tpu.memory_space<vmem>>, vector<1x16xf32>
    %18 = vector.broadcast %17 : vector<1x16xf32> to vector<8x16xf32>
    %19 = arith.addf %16, %18 : vector<8x16xf32>
    %c0_17 = arith.constant 0 : index
    %c0_18 = arith.constant 0 : index
    %20 = vector.load %arg8[%c0_17, %c0_18] : memref<8x16xf32, #tpu.memory_space<vmem>>, vector<8x16xf32>
    tpu.vector_store %arg8[%c0_17, %c0_18], %19 {strides = array<i32>} : memref<8x16xf32, #tpu.memory_space<vmem>>, vector<8x16xf32>,
    return
  }
  func.func @transform_0(%arg0: i32) -> (i32, i32) {
    %c0_i32 = arith.constant 0 : i32
    %c0_i32_0 = arith.constant 0 : i32
    return %arg0, %c0_i32 : i32, i32
  }
  func.func @transform_1(%arg0: i32) -> (i32, i32) {
    %c0_i32 = arith.constant 0 : i32
    %c0_i32_0 = arith.constant 0 : i32
    %c0_i32_1 = arith.constant 0 : i32
    return %c0_i32, %c0_i32_0 : i32, i32
  }
  func.func @transform_2(%arg0: i32) -> (i32, i32) {
    %c0_i32 = arith.constant 0 : i32
    %c0_i32_0 = arith.constant 0 : i32
    %c0_i32_1 = arith.constant 0 : i32
    return %c0_i32, %c0_i32_0 : i32, i32
  }
  func.func @transform_3(%arg0: i32) -> (i32, i32) {
    %c0_i32 = arith.constant 0 : i32
    %c0_i32_0 = arith.constant 0 : i32
    %c0_i32_1 = arith.constant 0 : i32
    return %c0_i32, %c0_i32_0 : i32, i32
  }
  func.func @transform_4(%arg0: i32) -> (i32, i32) {
    %c0_i32 = arith.constant 0 : i32
    %c0_i32_0 = arith.constant 0 : i32
    %c0_i32_1 = arith.constant 0 : i32
    return %c0_i32, %c0_i32_0 : i32, i32
  }
  func.func @transform_5(%arg0: i32) -> (i32, i32) {
    %c0_i32 = arith.constant 0 : i32
    %c0_i32_0 = arith.constant 0 : i32
    %c0_i32_1 = arith.constant 0 : i32
    return %c0_i32, %c0_i32_0 : i32, i32
  }
  func.func @transform_6(%arg0: i32) -> (i32, i32) {
    %c0_i32 = arith.constant 0 : i32
    %c0_i32_0 = arith.constant 0 : i32
    %c0_i32_1 = arith.constant 0 : i32
    return %c0_i32, %c0_i32_0 : i32, i32
  }
  func.func @transform_7(%arg0: i32) -> (i32, i32) {
    %c0_i32 = arith.constant 0 : i32
    %c0_i32_0 = arith.constant 0 : i32
    return %arg0, %c0_i32 : i32, i32
  }
}

</mosaic_0001>

<llo_original>
// kernel: mlp_forward.1
$region0: #{mlp_forward.1}
  #allocation0 [shape = 'u32[]', space=smem, size = 0x4, offset = 0x4, fixed_abs, tag = 'smem constant byte address 0x4 - core index']
  #allocation1 [shape = 'u32[144,128]{1,0:T(1,128)}', space=vmem, size = 0x12000, scoped, tag = 'internal scratch']
  %s0 = inlined_call_operand.vmem [shape: f32[8,32], index: 0, kind: input, shape index: {}]
  %s1 = inlined_call_operand.hbm [shape: f32[32,128], index: 1, kind: input, shape index: {}]
  %s2 = inlined_call_operand.vmem [shape: f32[1,128], index: 2, kind: input, shape index: {}]
  %s3 = inlined_call_operand.vmem [shape: f32[128,128], index: 3, kind: input, shape index: {}]
  %s4 = inlined_call_operand.vmem [shape: f32[1,128], index: 4, kind: input, shape index: {}]
  %s5 = inlined_call_operand.vmem [shape: f32[128,16], index: 5, kind: input, shape index: {}]
  %s6 = inlined_call_operand.vmem [shape: f32[1,16], index: 6, kind: input, shape index: {}]
  %s7 = inlined_call_operand.hbm [shape: f32[8,16], index: 7, kind: output, shape index: {}]
  %s8 = sld [smem:[#allocation0]]
  $region42: #{mlp_forward.1} parent=0
    _
  %s10 = ssub.s32 1, %s8
  %s11 = scalar_select 0, %s10, %s8
  $region1: #{mlp_forward.1} parent=0
    #allocation2 [shape = 'u8[16384]{0}', space=vmem, size = 0x4000, scoped, tag = 'input window, operand 1, single buffered']
    #allocation3 [shape = 's32[1]{0}', space=sflag, size = 0x4, scoped, tag = 'scoped memory for mlp_forward.1']
    #allocation4 [shape = 's32[1]{0}', space=sflag, size = 0x4, scoped, tag = 'scoped memory for mlp_forward.1']
    #allocation5 [shape = 'u8[4096]{0}', space=vmem, size = 0x1000, scoped, tag = 'output window, operand 0, single buffered']
    %12 = vsyncpa [#allocation3], 0
    %13 = vsyncpa [#allocation4], 0
    // Predicated region
    $region2: #{mlp_forward.1} parent=1 // pred_check
      _
    $region3: #{mlp_forward.1} parent=1 // pred_check_branch
      %15 = sbr.rel (0) target = $region5
    $region4: #{mlp_forward.1} parent=1 // pred_region
      _
    $region5: #{mlp_forward.1} parent=1 // pred_fallthru
      _
    // Predicated region
    $region6: #{mlp_forward.1} parent=1 // pred_check
      _
    $region7: #{mlp_forward.1} parent=1 // pred_check_branch
      %17 = sbr.rel (0) target = $region9
    $region8: #{mlp_forward.1} parent=1 // pred_region
      %s19 = ssub.s32 512, 512
      %20 = vsyncadd [#allocation3], %s19
      %s21 = sshll.u32 [#allocation2], 4
      %s22 = int_to_ptr.vmem [resolvable:$true] %s21
      %27 = dma.hbm_to_vmem [thread:$0]  %s1, 512, %s22, [#allocation3], 128, 128, 8
    $region9: #{mlp_forward.1} parent=1 // pred_fallthru
      _
    // Predicated region
    $region10: #{mlp_forward.1} parent=1 // pred_check
      _
    $region11: #{mlp_forward.1} parent=1 // pred_check_branch
      %29 = sbr.rel (0) target = $region13
    $region12: #{mlp_forward.1} parent=1 // pred_region
      _
    $region13: #{mlp_forward.1} parent=1 // pred_fallthru
      _
    // Predicated region
    $region14: #{mlp_forward.1} parent=1 // pred_check
      _
    $region15: #{mlp_forward.1} parent=1 // pred_check_branch
      %31 = sbr.rel (0) target = $region17
    $region16: #{mlp_forward.1} parent=1 // pred_region
      _
    $region17: #{mlp_forward.1} parent=1 // pred_fallthru
      _
    // Predicated region
    $region18: #{mlp_forward.1} parent=1 // pred_check
      _
    $region19: #{mlp_forward.1} parent=1 // pred_check_branch
      %33 = sbr.rel (0) target = $region21
    $region20: #{mlp_forward.1} parent=1 // pred_region
      _
    $region21: #{mlp_forward.1} parent=1 // pred_fallthru
      _
    // Predicated region
    $region22: #{mlp_forward.1} parent=1 // pred_check
      _
    $region23: #{mlp_forward.1} parent=1 // pred_check_branch
      %35 = sbr.rel (0) target = $region25
    $region24: #{mlp_forward.1} parent=1 // pred_region
      _
    $region25: #{mlp_forward.1} parent=1 // pred_fallthru
      _
    // Predicated region
    $region26: #{mlp_forward.1} parent=1 // pred_check
      _
    $region27: #{mlp_forward.1} parent=1 // pred_check_branch
      %37 = sbr.rel (0) target = $region29
    $region28: #{mlp_forward.1} parent=1 // pred_region
      _
    $region29: #{mlp_forward.1} parent=1 // pred_fallthru
      _
    // Predicated region
    $region30: #{mlp_forward.1} parent=1 // pred_check
      _
    $region31: #{mlp_forward.1} parent=1 // pred_check_branch
      %39 = sbr.rel (0) target = $region33
    $region32: #{mlp_forward.1} parent=1 // pred_region
      %40 = dma.done [#allocation3], 512
    $region33: #{mlp_forward.1} parent=1 // pred_fallthru
      _
    %v41 = vld [vmem:[%s0] sm:$0xff]
    %v42 = vld [vmem:[#allocation2] sm:$0xff]
    %v43 = vld [vmem:[#allocation2 + $0x8] sm:$0xff]
    %v44 = vld [vmem:[#allocation2 + $0x10] sm:$0xff]
    %v45 = vld [vmem:[#allocation2 + $0x18] sm:$0xff]
    %v46 = vld [vmem:[%s2] sm:$0x1]
    %v48 = vlaneseq
    %v49 = vshrl.u32 %v48, 7
    %v50 = vsub.s32 0, %v49
    %v51 = vrot.slane %v46, %v50
    %vm53 = vcmask 261120
    %v55 = vsel %vm53, %v41, 0
    %57 = vmatprep.subr.mxu0 0.0
    %58 = vmatpush1.msra.mxu0 %v42
    %59 = vmatprep.subr.mxu0 0.0
    %60 = vmatpush1.msra.mxu0 %v43
    %61 = vmatprep.subr.mxu0 0.0
    %62 = vmatpush1.msra.mxu0 %v44
    %63 = vmatprep.subr.mxu0 0.0
    %64 = vmatpush1.msra.mxu0 %v45
    %65 = vmatprep.subr.mxu0 0.0
    %66 = vmatpush1.msra.mxu0 0.0
    %67 = vmatprep.subr.mxu0 0.0
    %68 = vmatpush1.msra.mxu0 0.0
    %69 = vmatprep.subr.mxu0 0.0
    %70 = vmatpush1.msra.mxu0 0.0
    %71 = vmatprep.subr.mxu0 0.0
    %72 = vmatpush1.msra.mxu0 0.0
    %73 = vmatprep.subr.mxu0 0.0
    %74 = vmatpush1.msra.mxu0 0.0
    %75 = vmatprep.subr.mxu0 0.0
    %76 = vmatpush1.msra.mxu0 0.0
    %77 = vmatprep.subr.mxu0 0.0
    %78 = vmatpush1.msra.mxu0 0.0
    %79 = vmatprep.subr.mxu0 0.0
    %80 = vmatpush1.msra.mxu0 0.0
    %81 = vmatprep.subr.mxu0 0.0
    %82 = vmatpush1.msra.mxu0 0.0
    %83 = vmatprep.subr.mxu0 0.0
    %84 = vmatpush1.msra.mxu0 0.0
    %85 = vmatprep.subr.mxu0 0.0
    %86 = vmatpush1.msra.mxu0 0.0
    %87 = vmatprep.subr.mxu0 0.0
    %88 = vmatpush1.msra.mxu0 0.0
    %89 = vmatprep.subr.mxu0 0.0
    %90 = vmatpush1.msra.mxu0 0.0
    %91 = vmatprep.subr.mxu0 0.0
    %92 = vmatpush1.msra.mxu0 0.0
    %93 = vmatprep.subr.mxu0 0.0
    %94 = vmatpush1.msra.mxu0 0.0
    %95 = vmatprep.subr.mxu0 0.0
    %96 = vmatpush1.msra.mxu0 0.0
    %97 = vmatprep.subr.mxu0 0.0
    %98 = vmatpush1.msra.mxu0 0.0
    %99 = vmatprep.subr.mxu0 0.0
    %100 = vmatpush1.msra.mxu0 0.0
    %101 = vmatprep.subr.mxu0 0.0
    %102 = vmatpush1.msra.mxu0 0.0
    %103 = vmatprep.subr.mxu0 0.0
    %104 = vmatpush1.msra.mxu0 0.0
    %105 = vmatprep.subr.mxu0 0.0
    %106 = vmatpush1.msra.mxu0 0.0
    %107 = vmatprep.subr.mxu0 0.0
    %108 = vmatpush1.msra.mxu0 0.0
    %109 = vmatprep.subr.mxu0 0.0
    %110 = vmatpush1.msra.mxu0 0.0
    %111 = vmatprep.subr.mxu0 0.0
    %112 = vmatpush1.msra.mxu0 0.0
    %113 = vmatprep.subr.mxu0 0.0
    %114 = vmatpush1.msra.mxu0 0.0
    %115 = vmatprep.subr.mxu0 0.0
    %116 = vmatpush1.msra.mxu0 0.0
    %117 = vmatprep.subr.mxu0 0.0
    %118 = vmatpush1.msra.mxu0 0.0
    %119 = vmatprep.subr.mxu0 0.0
    %120 = vmatpush1.msra.mxu0 0.0
    %121 = vmatprep.mubr.f32.mxu0 0.0
    %122 = vmatmul.mubr.f32.gmra.mrb[0].mxu0 %v55
    %v123 = vpop.f32.mrb[0].mxu0
    %v124 = vadd.f32 %v51, %v123
    %v125 = vpop.f32.mrb[0].mxu0
    %126 = vdwg.mxu0
    %v127 = vmax.f32 %v124, 0.0
    %v128 = vld [vmem:[%s3] sm:$0xff]
    %v129 = vld [vmem:[%s3 + $0x8] sm:$0xff]
    %v130 = vld [vmem:[%s3 + $0x10] sm:$0xff]
    %v131 = vld [vmem:[%s3 + $0x18] sm:$0xff]
    %v132 = vld [vmem:[%s3 + $0x20] sm:$0xff]
    %v133 = vld [vmem:[%s3 + $0x28] sm:$0xff]
    %v134 = vld [vmem:[%s3 + $0x30] sm:$0xff]
    %v135 = vld [vmem:[%s3 + $0x38] sm:$0xff]
    %v136 = vld [vmem:[%s3 + $0x40] sm:$0xff]
    %v137 = vld [vmem:[%s3 + $0x48] sm:$0xff]
    %v138 = vld [vmem:[%s3 + $0x50] sm:$0xff]
    %v139 = vld [vmem:[%s3 + $0x58] sm:$0xff]
    %v140 = vld [vmem:[%s3 + $0x60] sm:$0xff]
    %v141 = vld [vmem:[%s3 + $0x68] sm:$0xff]
    %v142 = vld [vmem:[%s3 + $0x70] sm:$0xff]
    %v143 = vld [vmem:[%s3 + $0x78] sm:$0xff]
    %v144 = vld [vmem:[%s4] sm:$0x1]
    %v146 = vlaneseq
    %v147 = vshrl.u32 %v146, 7
    %v148 = vsub.s32 0, %v147
    %v149 = vrot.slane %v144, %v148
    %151 = vmatprep.subr.mxu0 0.0
    %152 = vmatpush1.msra.mxu0 %v128
    %153 = vmatprep.subr.mxu0 0.0
    %154 = vmatpush1.msra.mxu0 %v129
    %155 = vmatprep.subr.mxu0 0.0
    %156 = vmatpush1.msra.mxu0 %v130
    %157 = vmatprep.subr.mxu0 0.0
    %158 = vmatpush1.msra.mxu0 %v131
    %159 = vmatprep.subr.mxu0 0.0
    %160 = vmatpush1.msra.mxu0 %v132
    %161 = vmatprep.subr.mxu0 0.0
    %162 = vmatpush1.msra.mxu0 %v133
    %163 = vmatprep.subr.mxu0 0.0
    %164 = vmatpush1.msra.mxu0 %v134
    %165 = vmatprep.subr.mxu0 0.0
    %166 = vmatpush1.msra.mxu0 %v135
    %167 = vmatprep.subr.mxu0 0.0
    %168 = vmatpush1.msra.mxu0 %v136
    %169 = vmatprep.subr.mxu0 0.0
    %170 = vmatpush1.msra.mxu0 %v137
    %171 = vmatprep.subr.mxu0 0.0
    %172 = vmatpush1.msra.mxu0 %v138
    %173 = vmatprep.subr.mxu0 0.0
    %174 = vmatpush1.msra.mxu0 %v139
    %175 = vmatprep.subr.mxu0 0.0
    %176 = vmatpush1.msra.mxu0 %v140
    %177 = vmatprep.subr.mxu0 0.0
    %178 = vmatpush1.msra.mxu0 %v141
    %179 = vmatprep.subr.mxu0 0.0
    %180 = vmatpush1.msra.mxu0 %v142
    %181 = vmatprep.subr.mxu0 0.0
    %182 = vmatpush1.msra.mxu0 %v143
    %183 = vmatprep.subr.mxu0 0.0
    %184 = vmatpush1.msra.mxu0 0.0
    %185 = vmatprep.subr.mxu0 0.0
    %186 = vmatpush1.msra.mxu0 0.0
    %187 = vmatprep.subr.mxu0 0.0
    %188 = vmatpush1.msra.mxu0 0.0
    %189 = vmatprep.subr.mxu0 0.0
    %190 = vmatpush1.msra.mxu0 0.0
    %191 = vmatprep.subr.mxu0 0.0
    %192 = vmatpush1.msra.mxu0 0.0
    %193 = vmatprep.subr.mxu0 0.0
    %194 = vmatpush1.msra.mxu0 0.0
    %195 = vmatprep.subr.mxu0 0.0
    %196 = vmatpush1.msra.mxu0 0.0
    %197 = vmatprep.subr.mxu0 0.0
    %198 = vmatpush1.msra.mxu0 0.0
    %199 = vmatprep.subr.mxu0 0.0
    %200 = vmatpush1.msra.mxu0 0.0
    %201 = vmatprep.subr.mxu0 0.0
    %202 = vmatpush1.msra.mxu0 0.0
    %203 = vmatprep.subr.mxu0 0.0
    %204 = vmatpush1.msra.mxu0 0.0
    %205 = vmatprep.subr.mxu0 0.0
    %206 = vmatpush1.msra.mxu0 0.0
    %207 = vmatprep.subr.mxu0 0.0
    %208 = vmatpush1.msra.mxu0 0.0
    %209 = vmatprep.subr.mxu0 0.0
    %210 = vmatpush1.msra.mxu0 0.0
    %211 = vmatprep.subr.mxu0 0.0
    %212 = vmatpush1.msra.mxu0 0.0
    %213 = vmatprep.subr.mxu0 0.0
    %214 = vmatpush1.msra.mxu0 0.0
    %215 = vmatprep.mubr.f32.mxu0 0.0
    %216 = vmatmul.mubr.f32.gmra.mrb[0].mxu0 %v127
    %v217 = vpop.f32.mrb[0].mxu0
    %v218 = vadd.f32 %v149, %v217
    %v219 = vpop.f32.mrb[0].mxu0
    %220 = vdwg.mxu0
    %v221 = vmax.f32 %v218, 0.0
    %v222 = vld [vmem:[%s5] sm:$0xff]
    %v223 = vld [vmem:[%s5 + $0x8] sm:$0xff]
    %v224 = vld [vmem:[%s5 + $0x10] sm:$0xff]
    %v225 = vld [vmem:[%s5 + $0x18] sm:$0xff]
    %v226 = vld [vmem:[%s5 + $0x20] sm:$0xff]
    %v227 = vld [vmem:[%s5 + $0x28] sm:$0xff]
    %v228 = vld [vmem:[%s5 + $0x30] sm:$0xff]
    %v229 = vld [vmem:[%s5 + $0x38] sm:$0xff]
    %v230 = vld [vmem:[%s5 + $0x40] sm:$0xff]
    %v231 = vld [vmem:[%s5 + $0x48] sm:$0xff]
    %v232 = vld [vmem:[%s5 + $0x50] sm:$0xff]
    %v233 = vld [vmem:[%s5 + $0x58] sm:$0xff]
    %v234 = vld [vmem:[%s5 + $0x60] sm:$0xff]
    %v235 = vld [vmem:[%s5 + $0x68] sm:$0xff]
    %v236 = vld [vmem:[%s5 + $0x70] sm:$0xff]
    %v237 = vld [vmem:[%s5 + $0x78] sm:$0xff]
    %v238 = vld [vmem:[%s6] sm:$0x1]
    %v240 = vlaneseq
    %v241 = vshrl.u32 %v240, 7
    %v242 = vsub.s32 0, %v241
    %v243 = vrot.slane %v238, %v242
    %245 = vmatprep.subr.mxu0 0.0
    %246 = vmatpush1.msra.mxu0 %v222
    %247 = vmatprep.subr.mxu0 0.0
    %248 = vmatpush1.msra.mxu0 %v223
    %249 = vmatprep.subr.mxu0 0.0
    %250 = vmatpush1.msra.mxu0 %v224
    %251 = vmatprep.subr.mxu0 0.0
    %252 = vmatpush1.msra.mxu0 %v225
    %253 = vmatprep.subr.mxu0 0.0
    %254 = vmatpush1.msra.mxu0 %v226
    %255 = vmatprep.subr.mxu0 0.0
    %256 = vmatpush1.msra.mxu0 %v227
    %257 = vmatprep.subr.mxu0 0.0
    %258 = vmatpush1.msra.mxu0 %v228
    %259 = vmatprep.subr.mxu0 0.0
    %260 = vmatpush1.msra.mxu0 %v229
    %261 = vmatprep.subr.mxu0 0.0
    %262 = vmatpush1.msra.mxu0 %v230
    %263 = vmatprep.subr.mxu0 0.0
    %264 = vmatpush1.msra.mxu0 %v231
    %265 = vmatprep.subr.mxu0 0.0
    %266 = vmatpush1.msra.mxu0 %v232
    %267 = vmatprep.subr.mxu0 0.0
    %268 = vmatpush1.msra.mxu0 %v233
    %269 = vmatprep.subr.mxu0 0.0
    %270 = vmatpush1.msra.mxu0 %v234
    %271 = vmatprep.subr.mxu0 0.0
    %272 = vmatpush1.msra.mxu0 %v235
    %273 = vmatprep.subr.mxu0 0.0
    %274 = vmatpush1.msra.mxu0 %v236
    %275 = vmatprep.subr.mxu0 0.0
    %276 = vmatpush1.msra.mxu0 %v237
    %277 = vmatprep.subr.mxu0 0.0
    %278 = vmatpush1.msra.mxu0 0.0
    %279 = vmatprep.subr.mxu0 0.0
    %280 = vmatpush1.msra.mxu0 0.0
    %281 = vmatprep.subr.mxu0 0.0
    %282 = vmatpush1.msra.mxu0 0.0
    %283 = vmatprep.subr.mxu0 0.0
    %284 = vmatpush1.msra.mxu0 0.0
    %285 = vmatprep.subr.mxu0 0.0
    %286 = vmatpush1.msra.mxu0 0.0
    %287 = vmatprep.subr.mxu0 0.0
    %288 = vmatpush1.msra.mxu0 0.0
    %289 = vmatprep.subr.mxu0 0.0
    %290 = vmatpush1.msra.mxu0 0.0
    %291 = vmatprep.subr.mxu0 0.0
    %292 = vmatpush1.msra.mxu0 0.0
    %293 = vmatprep.subr.mxu0 0.0
    %294 = vmatpush1.msra.mxu0 0.0
    %295 = vmatprep.subr.mxu0 0.0
    %296 = vmatpush1.msra.mxu0 0.0
    %297 = vmatprep.subr.mxu0 0.0
    %298 = vmatpush1.msra.mxu0 0.0
    %299 = vmatprep.subr.mxu0 0.0
    %300 = vmatpush1.msra.mxu0 0.0
    %301 = vmatprep.subr.mxu0 0.0
    %302 = vmatpush1.msra.mxu0 0.0
    %303 = vmatprep.subr.mxu0 0.0
    %304 = vmatpush1.msra.mxu0 0.0
    %305 = vmatprep.subr.mxu0 0.0
    %306 = vmatpush1.msra.mxu0 0.0
    %307 = vmatprep.subr.mxu0 0.0
    %308 = vmatpush1.msra.mxu0 0.0
    %309 = vmatprep.mubr.f32.mxu0 0.0
    %310 = vmatmul.mubr.f32.gmra.mrb[0].mxu0 %v221
    %v311 = vpop.f32.mrb[0].mxu0
    %v312 = vadd.f32 %v243, %v311
    %v313 = vpop.f32.mrb[0].mxu0
    %314 = vdwg.mxu0
    %vm315 = vcmask 130048
    %316 = vst.msk [vmem:[#allocation5] sm:$0xff] %vm315, %v312
    // Predicated region
    $region34: #{mlp_forward.1} parent=1 // pred_check
      _
    $region35: #{mlp_forward.1} parent=1 // pred_check_branch
      %318 = sbr.rel (0) target = $region37
    $region36: #{mlp_forward.1} parent=1 // pred_region
      %s320 = ssub.s32 128, 128
      %321 = vsyncadd [#allocation4], %s320
      %s323 = sshll.u32 [#allocation5], 4
      %s324 = int_to_ptr.vmem [resolvable:$true] %s323
      %326 = dma.vmem_to_hbm [thread:$0]  %s324, 128, %s7, [#allocation4]
    $region37: #{mlp_forward.1} parent=1 // pred_fallthru
      _
    // Predicated region
    $region38: #{mlp_forward.1} parent=1 // pred_check
      _
    $region39: #{mlp_forward.1} parent=1 // pred_check_branch
      %328 = sbr.rel (0) target = $region41
    $region40: #{mlp_forward.1} parent=1 // pred_region
      %329 = dma.done [#allocation4], 128
    $region41: #{mlp_forward.1} parent=1 // pred_fallthru
      _
    %330 = vsyncpa [#allocation3], 1
    %331 = vsyncpa [#allocation4], 1

</llo_original>
